<compile_context>
chip_gen: v5e
topology: v5e:2x2
jax: 0.10.0
libtpu: 0.0.40
codegen_flags: <defaults>
</compile_context>

<pallas_src>
import functools

import jax
import jax.numpy as jnp
from jax.experimental import pallas as pl
from jax.experimental.pallas import tpu as pltpu

LANE = 128  # TPU lane width


def dqn_kernel(x_ref, w1_ref, b1_ref, w2_ref, b2_ref, w3_ref, b3_ref, o_ref):
    # Fused MLP: relu(x @ W1 + b1) -> relu(. @ W2 + b2) -> . @ W3 + b3
    x = x_ref[...]  # (TB, 128) bf16

    h1 = jnp.dot(x, w1_ref[...], preferred_element_type=jnp.float32) + b1_ref[...]
    h1 = jnp.maximum(h1, 0.0).astype(jnp.bfloat16)

    h2 = jnp.dot(h1, w2_ref[...], preferred_element_type=jnp.float32) + b2_ref[...]
    h2 = jnp.maximum(h2, 0.0).astype(jnp.bfloat16)

    out = jnp.dot(h2, w3_ref[...], preferred_element_type=jnp.float32) + b3_ref[...]
    o_ref[...] = out.astype(o_ref.dtype)


def _round_up(n, m):
    return (n + m - 1) // m * m


def _pad_to(a, shape):
    pads = [(0, t - s) for s, t in zip(a.shape, shape)]
    return jnp.pad(a, pads)


@functools.partial(jax.jit, static_argnames=("tb",))
def dqn_forward(x, params, tb=256):
    """x: (B, n_observations) float32; params: dict of (in, out) weights / (out,) biases."""
    w1, b1, w2, b2, w3, b3 = (
        params["w1"], params["b1"], params["w2"], params["b2"], params["w3"], params["b3"]
    )
    B, n_obs = x.shape
    hidden = w1.shape[1]
    n_actions = w3.shape[1]

    # Lane-aligned padded dims (zero padding is numerically exact for this MLP).
    k_in = _round_up(n_obs, LANE)
    k_h = _round_up(hidden, LANE)
    k_out = _round_up(n_actions, LANE)
    b_pad = _round_up(max(B, 1), tb)

    # bf16 operands for the MXU; biases stay f32 (bias add / ReLU in f32).
    x_p = _pad_to(x, (b_pad, k_in)).astype(jnp.bfloat16)
    w1_p = _pad_to(w1, (k_in, k_h)).astype(jnp.bfloat16)
    b1_p = _pad_to(b1.reshape(1, -1), (1, k_h)).astype(jnp.float32)
    w2_p = _pad_to(w2, (k_h, k_h)).astype(jnp.bfloat16)
    b2_p = _pad_to(b2.reshape(1, -1), (1, k_h)).astype(jnp.float32)
    w3_p = _pad_to(w3, (k_h, k_out)).astype(jnp.bfloat16)
    b3_p = _pad_to(b3.reshape(1, -1), (1, k_out)).astype(jnp.float32)

    grid = (b_pad // tb,)
    resident = lambda shape: pl.BlockSpec(shape, lambda i: (0, 0))  # weights stay in VMEM

    out_padded = pl.pallas_call(
        dqn_kernel,
        out_shape=jax.ShapeDtypeStruct((b_pad, k_out), jnp.float32),
        grid=grid,
        in_specs=[
            pl.BlockSpec((tb, k_in), lambda i: (i, 0)),   # x tile, pipelined over batch
            resident((k_in, k_h)),
            resident((1, k_h)),
            resident((k_h, k_h)),
            resident((1, k_h)),
            resident((k_h, k_out)),
            resident((1, k_out)),
        ],
        out_specs=pl.BlockSpec((tb, k_out), lambda i: (i, 0)),  # lane-dense (128-wide) output
        compiler_params=pltpu.CompilerParams(
            dimension_semantics=("parallel",),  # shard batch tiles across cores (v7x)
        ),
    )(x_p, w1_p, b1_p, w2_p, b2_p, w3_p, b3_p)

    return out_padded[:B, :n_actions]


def init_params(key, n_observations, n_actions=1, hidden=64):
    """PyTorch-style init U(-1/sqrt(fan_in), 1/sqrt(fan_in)); weights stored as (in, out)."""
    keys = jax.random.split(key, 6)

    def layer(kw, kb, fan_in, fan_out):
        bound = 1.0 / jnp.sqrt(jnp.float32(fan_in))
        w = jax.random.uniform(kw, (fan_in, fan_out), jnp.float32, -bound, bound)
        b = jax.random.uniform(kb, (fan_out,), jnp.float32, -bound, bound)
        return w, b

    w1, b1 = layer(keys[0], keys[1], n_observations, hidden)
    w2, b2 = layer(keys[2], keys[3], hidden, hidden)
    w3, b3 = layer(keys[4], keys[5], hidden, n_actions)
    return {"w1": w1, "b1": b1, "w2": w2, "b2": b2, "w3": w3, "b3": b3}


def dqn_reference(x, params):
    h1 = jnp.maximum(x @ params["w1"] + params["b1"], 0.0)
    h2 = jnp.maximum(h1 @ params["w2"] + params["b2"], 0.0)
    return h2 @ params["w3"] + params["b3"]


if __name__ == "__main__":
    key = jax.random.PRNGKey(0)
    k_param, k_x1, k_x2 = jax.random.split(key, 3)

    n_observations = 32
    n_actions = 1  # PyTorch module default
    params = init_params(k_param, n_observations, n_actions)

    # Small primary test (single grid step).
    batch = 8
    x = jax.random.normal(k_x1, (batch, n_observations), jnp.float32)
    out = jax.block_until_ready(dqn_forward(x, params))
    ref = dqn_reference(x, params)
    assert out.shape == (batch, n_actions)
    # bf16 matmul operands -> loosened tolerance vs f32 reference.
    assert jnp.allclose(out, ref, atol=3e-2, rtol=3e-2), float(jnp.max(jnp.abs(out - ref)))

    # Secondary check exercising multiple batch tiles (grid > 1) with padding/slicing.
    batch2 = 384
    x2 = jax.random.normal(k_x2, (batch2, n_observations), jnp.float32)
    out2 = jax.block_until_ready(dqn_forward(x2, params))
    ref2 = dqn_reference(x2, params)
    assert out2.shape == (batch2, n_actions)
    assert jnp.allclose(out2, ref2, atol=3e-2, rtol=3e-2), float(jnp.max(jnp.abs(out2 - ref2)))

    print("KERNEL_OK")
</pallas_src>

<mosaic_0001>
module attributes {stable_mosaic.version = 11 : i64} {
  func.func @dqn_kernel(%arg0: i32, %arg1: memref<256x128xbf16, #tpu.memory_space<vmem>>, %arg2: memref<128x128xbf16, #tpu.memory_space<vmem>>, %arg3: memref<1x128xf32, #tpu.memory_space<vmem>>, %arg4: memref<128x128xbf16, #tpu.memory_space<vmem>>, %arg5: memref<1x128xf32, #tpu.memory_space<vmem>>, %arg6: memref<128x128xbf16, #tpu.memory_space<vmem>>, %arg7: memref<1x128xf32, #tpu.memory_space<vmem>>, %arg8: memref<256x128xf32, #tpu.memory_space<vmem>>) attributes {dimension_semantics = [#tpu.dimension_semantics<parallel>], iteration_bounds = array<i64: 1>, scalar_prefetch = 0 : i64, scratch_operands = 0 : i64, tpu.core_type = #tpu.core_type<tc>, window_params = [{transform_indices = @transform_0, window_bounds = array<i64: 256, 128>}, {pipeline_mode = #tpu.pipeline_mode<synchronous>, transform_indices = @transform_1, window_bounds = array<i64: 128, 128>}, {pipeline_mode = #tpu.pipeline_mode<synchronous>, transform_indices = @transform_2, window_bounds = array<i64: 1, 128>}, {pipeline_mode = #tpu.pipeline_mode<synchronous>, transform_indices = @transform_3, window_bounds = array<i64: 128, 128>}, {pipeline_mode = #tpu.pipeline_mode<synchronous>, transform_indices = @transform_4, window_bounds = array<i64: 1, 128>}, {pipeline_mode = #tpu.pipeline_mode<synchronous>, transform_indices = @transform_5, window_bounds = array<i64: 128, 128>}, {pipeline_mode = #tpu.pipeline_mode<synchronous>, transform_indices = @transform_6, window_bounds = array<i64: 1, 128>}, {transform_indices = @transform_7, window_bounds = array<i64: 256, 128>}]} {
    %c0 = arith.constant 0 : index
    %c0_0 = arith.constant 0 : index
    %0 = vector.load %arg1[%c0, %c0_0] : memref<256x128xbf16, #tpu.memory_space<vmem>>, vector<256x128xbf16>
    %c0_1 = arith.constant 0 : index
    %c0_2 = arith.constant 0 : index
    %1 = vector.load %arg2[%c0_1, %c0_2] : memref<128x128xbf16, #tpu.memory_space<vmem>>, vector<128x128xbf16>
    %cst = arith.constant dense<0.000000e+00> : vector<256x128xf32>
    %2 = tpu.matmul %0, %1, %cst {dimension_numbers = #tpu.dot_dimension_numbers<[1], [0], [0], [1], [0, 0, 1, 1], [], []>} : vector<256x128xbf16>, vector<128x128xbf16>, vector<256x128xf32> -> vector<256x128xf32>
    %c0_3 = arith.constant 0 : index
    %c0_4 = arith.constant 0 : index
    %3 = vector.load %arg3[%c0_3, %c0_4] : memref<1x128xf32, #tpu.memory_space<vmem>>, vector<1x128xf32>
    %4 = vector.broadcast %3 : vector<1x128xf32> to vector<256x128xf32>
    %5 = arith.addf %2, %4 : vector<256x128xf32>
    %cst_5 = arith.constant 0.000000e+00 : f32
    %6 = vector.broadcast %cst_5 : f32 to vector<256x128xf32>
    %7 = arith.maximumf %5, %6 : vector<256x128xf32>
    %8 = arith.truncf %7 : vector<256x128xf32> to vector<256x128xbf16>
    %c0_6 = arith.constant 0 : index
    %c0_7 = arith.constant 0 : index
    %9 = vector.load %arg4[%c0_6, %c0_7] : memref<128x128xbf16, #tpu.memory_space<vmem>>, vector<128x128xbf16>
    %cst_8 = arith.constant dense<0.000000e+00> : vector<256x128xf32>
    %10 = tpu.matmul %8, %9, %cst_8 {dimension_numbers = #tpu.dot_dimension_numbers<[1], [0], [0], [1], [0, 0, 1, 1], [], []>} : vector<256x128xbf16>, vector<128x128xbf16>, vector<256x128xf32> -> vector<256x128xf32>
    %c0_9 = arith.constant 0 : index
    %c0_10 = arith.constant 0 : index
    %11 = vector.load %arg5[%c0_9, %c0_10] : memref<1x128xf32, #tpu.memory_space<vmem>>, vector<1x128xf32>
    %12 = vector.broadcast %11 : vector<1x128xf32> to vector<256x128xf32>
    %13 = arith.addf %10, %12 : vector<256x128xf32>
    %cst_11 = arith.constant 0.000000e+00 : f32
    %14 = vector.broadcast %cst_11 : f32 to vector<256x128xf32>
    %15 = arith.maximumf %13, %14 : vector<256x128xf32>
    %16 = arith.truncf %15 : vector<256x128xf32> to vector<256x128xbf16>
    %c0_12 = arith.constant 0 : index
    %c0_13 = arith.constant 0 : index
    %17 = vector.load %arg6[%c0_12, %c0_13] : memref<128x128xbf16, #tpu.memory_space<vmem>>, vector<128x128xbf16>
    %cst_14 = arith.constant dense<0.000000e+00> : vector<256x128xf32>
    %18 = tpu.matmul %16, %17, %cst_14 {dimension_numbers = #tpu.dot_dimension_numbers<[1], [0], [0], [1], [0, 0, 1, 1], [], []>} : vector<256x128xbf16>, vector<128x128xbf16>, vector<256x128xf32> -> vector<256x128xf32>
    %c0_15 = arith.constant 0 : index
    %c0_16 = arith.constant 0 : index
    %19 = vector.load %arg7[%c0_15, %c0_16] : memref<1x128xf32, #tpu.memory_space<vmem>>, vector<1x128xf32>
    %20 = vector.broadcast %19 : vector<1x128xf32> to vector<256x128xf32>
    %21 = arith.addf %18, %20 : vector<256x128xf32>
    %c0_17 = arith.constant 0 : index
    %c0_18 = arith.constant 0 : index
    %22 = vector.load %arg8[%c0_17, %c0_18] : memref<256x128xf32, #tpu.memory_space<vmem>>, vector<256x128xf32>
    tpu.vector_store %arg8[%c0_17, %c0_18], %21 {strides = array<i32>} : memref<256x128xf32, #tpu.memory_space<vmem>>, vector<256x128xf32>,
    return
  }
  func.func @transform_0(%arg0: i32) -> (i32, i32) {
    %c0_i32 = arith.constant 0 : i32
    %c0_i32_0 = arith.constant 0 : i32
    return %arg0, %c0_i32 : i32, i32
  }
  func.func @transform_1(%arg0: i32) -> (i32, i32) {
    %c0_i32 = arith.constant 0 : i32
    %c0_i32_0 = arith.constant 0 : i32
    %c0_i32_1 = arith.constant 0 : i32
    return %c0_i32, %c0_i32_0 : i32, i32
  }
  func.func @transform_2(%arg0: i32) -> (i32, i32) {
    %c0_i32 = arith.constant 0 : i32
    %c0_i32_0 = arith.constant 0 : i32
    %c0_i32_1 = arith.constant 0 : i32
    return %c0_i32, %c0_i32_0 : i32, i32
  }
  func.func @transform_3(%arg0: i32) -> (i32, i32) {
    %c0_i32 = arith.constant 0 : i32
    %c0_i32_0 = arith.constant 0 : i32
    %c0_i32_1 = arith.constant 0 : i32
    return %c0_i32, %c0_i32_0 : i32, i32
  }
  func.func @transform_4(%arg0: i32) -> (i32, i32) {
    %c0_i32 = arith.constant 0 : i32
    %c0_i32_0 = arith.constant 0 : i32
    %c0_i32_1 = arith.constant 0 : i32
    return %c0_i32, %c0_i32_0 : i32, i32
  }
  func.func @transform_5(%arg0: i32) -> (i32, i32) {
    %c0_i32 = arith.constant 0 : i32
    %c0_i32_0 = arith.constant 0 : i32
    %c0_i32_1 = arith.constant 0 : i32
    return %c0_i32, %c0_i32_0 : i32, i32
  }
  func.func @transform_6(%arg0: i32) -> (i32, i32) {
    %c0_i32 = arith.constant 0 : i32
    %c0_i32_0 = arith.constant 0 : i32
    %c0_i32_1 = arith.constant 0 : i32
    return %c0_i32, %c0_i32_0 : i32, i32
  }
  func.func @transform_7(%arg0: i32) -> (i32, i32) {
    %c0_i32 = arith.constant 0 : i32
    %c0_i32_0 = arith.constant 0 : i32
    return %arg0, %c0_i32 : i32, i32
  }
}

</mosaic_0001>

<llo_original>
// kernel: dqn_forward.1
$region0: #{dqn_forward.1}
  #allocation0 [shape = 'u32[]', space=smem, size = 0x4, offset = 0x4, fixed_abs, tag = 'smem constant byte address 0x4 - core index']
  #allocation1 [shape = 'u32[72,128]{1,0:T(1,128)}', space=vmem, size = 0x9000, scoped, tag = 'internal scratch']
  %s0 = inlined_call_operand.vmem [shape: bf16[256,128], index: 0, kind: input, shape index: {}]
  %s1 = inlined_call_operand.vmem [shape: bf16[128,128], index: 1, kind: input, shape index: {}]
  %s2 = inlined_call_operand.vmem [shape: f32[1,128], index: 2, kind: input, shape index: {}]
  %s3 = inlined_call_operand.vmem [shape: bf16[128,128], index: 3, kind: input, shape index: {}]
  %s4 = inlined_call_operand.vmem [shape: f32[1,128], index: 4, kind: input, shape index: {}]
  %s5 = inlined_call_operand.vmem [shape: bf16[128,128], index: 5, kind: input, shape index: {}]
  %s6 = inlined_call_operand.vmem [shape: f32[1,128], index: 6, kind: input, shape index: {}]
  %s7 = inlined_call_operand.vmem [shape: f32[256,128], index: 7, kind: output, shape index: {}]
  %s8 = sld [smem:[#allocation0]]
  $region38: #{dqn_forward.1} parent=0
    _
  %s10 = ssub.s32 1, %s8
  %s11 = scalar_select 0, %s10, %s8
  // Predicated region
  $region2: #{dqn_forward.1} parent=0 // pred_check
    _
  $region3: #{dqn_forward.1} parent=0 // pred_check_branch
    %13 = sbr.rel (0) target = $region5
  $region4: #{dqn_forward.1} parent=0 // pred_region
    _
  $region5: #{dqn_forward.1} parent=0 // pred_fallthru
    _
  // Predicated region
  $region6: #{dqn_forward.1} parent=0 // pred_check
    _
  $region7: #{dqn_forward.1} parent=0 // pred_check_branch
    %15 = sbr.rel (0) target = $region9
  $region8: #{dqn_forward.1} parent=0 // pred_region
    _
  $region9: #{dqn_forward.1} parent=0 // pred_fallthru
    _
  // Predicated region
  $region10: #{dqn_forward.1} parent=0 // pred_check
    _
  $region11: #{dqn_forward.1} parent=0 // pred_check_branch
    %17 = sbr.rel (0) target = $region13
  $region12: #{dqn_forward.1} parent=0 // pred_region
    _
  $region13: #{dqn_forward.1} parent=0 // pred_fallthru
    _
  // Predicated region
  $region14: #{dqn_forward.1} parent=0 // pred_check
    _
  $region15: #{dqn_forward.1} parent=0 // pred_check_branch
    %19 = sbr.rel (0) target = $region17
  $region16: #{dqn_forward.1} parent=0 // pred_region
    _
  $region17: #{dqn_forward.1} parent=0 // pred_fallthru
    _
  // Predicated region
  $region18: #{dqn_forward.1} parent=0 // pred_check
    _
  $region19: #{dqn_forward.1} parent=0 // pred_check_branch
    %21 = sbr.rel (0) target = $region21
  $region20: #{dqn_forward.1} parent=0 // pred_region
    _
  $region21: #{dqn_forward.1} parent=0 // pred_fallthru
    _
  // Predicated region
  $region22: #{dqn_forward.1} parent=0 // pred_check
    _
  $region23: #{dqn_forward.1} parent=0 // pred_check_branch
    %23 = sbr.rel (0) target = $region25
  $region24: #{dqn_forward.1} parent=0 // pred_region
    _
  $region25: #{dqn_forward.1} parent=0 // pred_fallthru
    _
  // Predicated region
  $region26: #{dqn_forward.1} parent=0 // pred_check
    _
  $region27: #{dqn_forward.1} parent=0 // pred_check_branch
    %25 = sbr.rel (0) target = $region29
  $region28: #{dqn_forward.1} parent=0 // pred_region
    _
  $region29: #{dqn_forward.1} parent=0 // pred_fallthru
    _
  %v26 = vld [vmem:[%s0] sm:$0xf]
  %v27 = vld [vmem:[%s0 + $0x4] sm:$0xf]
  %v28 = vld [vmem:[%s0 + $0x8] sm:$0xf]
  %v29 = vld [vmem:[%s0 + $0xc] sm:$0xf]
  %v30 = vld [vmem:[%s0 + $0x10] sm:$0xf]
  %v31 = vld [vmem:[%s0 + $0x14] sm:$0xf]
  %v32 = vld [vmem:[%s0 + $0x18] sm:$0xf]
  %v33 = vld [vmem:[%s0 + $0x1c] sm:$0xf]
  %v34 = vld [vmem:[%s0 + $0x20] sm:$0xf]
  %v35 = vld [vmem:[%s0 + $0x24] sm:$0xf]
  %v36 = vld [vmem:[%s0 + $0x28] sm:$0xf]
  %v37 = vld [vmem:[%s0 + $0x2c] sm:$0xf]
  %v38 = vld [vmem:[%s0 + $0x30] sm:$0xf]
  %v39 = vld [vmem:[%s0 + $0x34] sm:$0xf]
  %v40 = vld [vmem:[%s0 + $0x38] sm:$0xf]
  %v41 = vld [vmem:[%s0 + $0x3c] sm:$0xf]
  %v42 = vld [vmem:[%s0 + $0x40] sm:$0xf]
  %v43 = vld [vmem:[%s0 + $0x44] sm:$0xf]
  %v44 = vld [vmem:[%s0 + $0x48] sm:$0xf]
  %v45 = vld [vmem:[%s0 + $0x4c] sm:$0xf]
  %v46 = vld [vmem:[%s0 + $0x50] sm:$0xf]
  %v47 = vld [vmem:[%s0 + $0x54] sm:$0xf]
  %v48 = vld [vmem:[%s0 + $0x58] sm:$0xf]
  %v49 = vld [vmem:[%s0 + $0x5c] sm:$0xf]
  %v50 = vld [vmem:[%s0 + $0x60] sm:$0xf]
  %v51 = vld [vmem:[%s0 + $0x64] sm:$0xf]
  %v52 = vld [vmem:[%s0 + $0x68] sm:$0xf]
  %v53 = vld [vmem:[%s0 + $0x6c] sm:$0xf]
  %v54 = vld [vmem:[%s0 + $0x70] sm:$0xf]
  %v55 = vld [vmem:[%s0 + $0x74] sm:$0xf]
  %v56 = vld [vmem:[%s0 + $0x78] sm:$0xf]
  %v57 = vld [vmem:[%s0 + $0x7c] sm:$0xf]
  %v58 = vld [vmem:[%s1] sm:$0xf]
  %v59 = vld [vmem:[%s1 + $0x4] sm:$0xf]
  %v60 = vld [vmem:[%s1 + $0x8] sm:$0xf]
  %v61 = vld [vmem:[%s1 + $0xc] sm:$0xf]
  %v62 = vld [vmem:[%s1 + $0x10] sm:$0xf]
  %v63 = vld [vmem:[%s1 + $0x14] sm:$0xf]
  %v64 = vld [vmem:[%s1 + $0x18] sm:$0xf]
  %v65 = vld [vmem:[%s1 + $0x1c] sm:$0xf]
  %v66 = vld [vmem:[%s1 + $0x20] sm:$0xf]
  %v67 = vld [vmem:[%s1 + $0x24] sm:$0xf]
  %v68 = vld [vmem:[%s1 + $0x28] sm:$0xf]
  %v69 = vld [vmem:[%s1 + $0x2c] sm:$0xf]
  %v70 = vld [vmem:[%s1 + $0x30] sm:$0xf]
  %v71 = vld [vmem:[%s1 + $0x34] sm:$0xf]
  %v72 = vld [vmem:[%s1 + $0x38] sm:$0xf]
  %v73 = vld [vmem:[%s1 + $0x3c] sm:$0xf]
  %v74 = vld [vmem:[%s2] sm:$0x1]
  %v76 = vperm.slane %v74, 0
  %v110 = vunpack.c.l.b16 %v26
  %v111 = vunpack.c.l.b16 %v27
  %v112 = vunpack.c.l.b16 %v28
  %v113 = vunpack.c.l.b16 %v29
  %v114 = vunpack.c.l.b16 %v30
  %v115 = vunpack.c.l.b16 %v31
  %v116 = vunpack.c.l.b16 %v32
  %v117 = vunpack.c.l.b16 %v33
  %v118 = vunpack.c.l.b16 %v34
  %v119 = vunpack.c.l.b16 %v35
  %v120 = vunpack.c.l.b16 %v36
  %v121 = vunpack.c.l.b16 %v37
  %v122 = vunpack.c.l.b16 %v38
  %v123 = vunpack.c.l.b16 %v39
  %v124 = vunpack.c.l.b16 %v40
  %v125 = vunpack.c.l.b16 %v41
  %v126 = vunpack.c.l.b16 %v42
  %v127 = vunpack.c.l.b16 %v43
  %v128 = vunpack.c.l.b16 %v44
  %v129 = vunpack.c.l.b16 %v45
  %v130 = vunpack.c.l.b16 %v46
  %v131 = vunpack.c.l.b16 %v47
  %v132 = vunpack.c.l.b16 %v48
  %v133 = vunpack.c.l.b16 %v49
  %v134 = vunpack.c.l.b16 %v50
  %v135 = vunpack.c.l.b16 %v51
  %v136 = vunpack.c.l.b16 %v52
  %v137 = vunpack.c.l.b16 %v53
  %v138 = vunpack.c.l.b16 %v54
  %v139 = vunpack.c.l.b16 %v55
  %v140 = vunpack.c.l.b16 %v56
  %v141 = vunpack.c.l.b16 %v57
  %v142 = vpack.c.b16 %v111, %v110
  %v143 = vpack.c.b16 %v113, %v112
  %v144 = vpack.c.b16 %v115, %v114
  %v145 = vpack.c.b16 %v117, %v116
  %v146 = vpack.c.b16 %v119, %v118
  %v147 = vpack.c.b16 %v121, %v120
  %v148 = vpack.c.b16 %v123, %v122
  %v149 = vpack.c.b16 %v125, %v124
  %v150 = vpack.c.b16 %v127, %v126
  %v151 = vpack.c.b16 %v129, %v128
  %v152 = vpack.c.b16 %v131, %v130
  %v153 = vpack.c.b16 %v133, %v132
  %v154 = vpack.c.b16 %v135, %v134
  %v155 = vpack.c.b16 %v137, %v136
  %v156 = vpack.c.b16 %v139, %v138
  %v157 = vpack.c.b16 %v141, %v140
  %v190 = vunpack.c.l.b16 %v58
  %v191 = vunpack.c.l.b16 %v59
  %v192 = vunpack.c.l.b16 %v60
  %v193 = vunpack.c.l.b16 %v61
  %v194 = vunpack.c.l.b16 %v62
  %v195 = vunpack.c.l.b16 %v63
  %v196 = vunpack.c.l.b16 %v64
  %v197 = vunpack.c.l.b16 %v65
  %v198 = vunpack.c.l.b16 %v66
  %v199 = vunpack.c.l.b16 %v67
  %v200 = vunpack.c.l.b16 %v68
  %v201 = vunpack.c.l.b16 %v69
  %v202 = vunpack.c.l.b16 %v70
  %v203 = vunpack.c.l.b16 %v71
  %v204 = vunpack.c.l.b16 %v72
  %v205 = vunpack.c.l.b16 %v73
  %v206 = vpack.c.b16 %v191, %v190
  %v207 = vpack.c.b16 %v193, %v192
  %v208 = vpack.c.b16 %v195, %v194
  %v209 = vpack.c.b16 %v197, %v196
  %v210 = vpack.c.b16 %v199, %v198
  %v211 = vpack.c.b16 %v201, %v200
  %v212 = vpack.c.b16 %v203, %v202
  %v213 = vpack.c.b16 %v205, %v204
  %222 = vmatpush.bf16.msra.mxu0 %v213
  %223 = vmatpush.bf16.msra.mxu0 %v212
  %224 = vmatpush.bf16.msra.mxu0 %v211
  %225 = vmatpush.bf16.msra.mxu0 %v210
  %226 = vmatpush.bf16.msra.mxu0 %v209
  %227 = vmatpush.bf16.msra.mxu0 %v208
  %228 = vmatpush.bf16.msra.mxu0 %v207
  %229 = vmatpush.bf16.msra.mxu0 %v206
  %230 = vmatmul.bf16.gmra.mxu0 %v142
  %v231 = vpop.f32.mrf.mxu0
  %v232 = vadd.f32 %v76, %v231
  %v233 = vpop.f32.mrf.mxu0
  %v234 = vadd.f32 %v76, %v233
  %235 = vmatmul.bf16.gmra.mxu0 %v143
  %v236 = vpop.f32.mrf.mxu0
  %v237 = vadd.f32 %v76, %v236
  %v238 = vpop.f32.mrf.mxu0
  %v239 = vadd.f32 %v76, %v238
  %240 = vmatmul.bf16.gmra.mxu0 %v144
  %v241 = vpop.f32.mrf.mxu0
  %v242 = vadd.f32 %v76, %v241
  %v243 = vpop.f32.mrf.mxu0
  %v244 = vadd.f32 %v76, %v243
  %245 = vmatmul.bf16.gmra.mxu0 %v145
  %v246 = vpop.f32.mrf.mxu0
  %v247 = vadd.f32 %v76, %v246
  %v248 = vpop.f32.mrf.mxu0
  %v249 = vadd.f32 %v76, %v248
  %250 = vmatmul.bf16.gmra.mxu0 %v146
  %v251 = vpop.f32.mrf.mxu0
  %v252 = vadd.f32 %v76, %v251
  %v253 = vpop.f32.mrf.mxu0
  %v254 = vadd.f32 %v76, %v253
  %255 = vmatmul.bf16.gmra.mxu0 %v147
  %v256 = vpop.f32.mrf.mxu0
  %v257 = vadd.f32 %v76, %v256
  %v258 = vpop.f32.mrf.mxu0
  %v259 = vadd.f32 %v76, %v258
  %260 = vmatmul.bf16.gmra.mxu0 %v148
  %v261 = vpop.f32.mrf.mxu0
  %v262 = vadd.f32 %v76, %v261
  %v263 = vpop.f32.mrf.mxu0
  %v264 = vadd.f32 %v76, %v263
  %265 = vmatmul.bf16.gmra.mxu0 %v149
  %v266 = vpop.f32.mrf.mxu0
  %v267 = vadd.f32 %v76, %v266
  %v268 = vpop.f32.mrf.mxu0
  %v269 = vadd.f32 %v76, %v268
  %270 = vmatmul.bf16.gmra.mxu0 %v150
  %v271 = vpop.f32.mrf.mxu0
  %v272 = vadd.f32 %v76, %v271
  %v273 = vpop.f32.mrf.mxu0
  %v274 = vadd.f32 %v76, %v273
  %275 = vmatmul.bf16.gmra.mxu0 %v151
  %v276 = vpop.f32.mrf.mxu0
  %v277 = vadd.f32 %v76, %v276
  %v278 = vpop.f32.mrf.mxu0
  %v279 = vadd.f32 %v76, %v278
  %280 = vmatmul.bf16.gmra.mxu0 %v152
  %v281 = vpop.f32.mrf.mxu0
  %v282 = vadd.f32 %v76, %v281
  %v283 = vpop.f32.mrf.mxu0
  %v284 = vadd.f32 %v76, %v283
  %285 = vmatmul.bf16.gmra.mxu0 %v153
  %v286 = vpop.f32.mrf.mxu0
  %v287 = vadd.f32 %v76, %v286
  %v288 = vpop.f32.mrf.mxu0
  %v289 = vadd.f32 %v76, %v288
  %290 = vmatmul.bf16.gmra.mxu0 %v154
  %v291 = vpop.f32.mrf.mxu0
  %v292 = vadd.f32 %v76, %v291
  %v293 = vpop.f32.mrf.mxu0
  %v294 = vadd.f32 %v76, %v293
  %295 = vmatmul.bf16.gmra.mxu0 %v155
  %v296 = vpop.f32.mrf.mxu0
  %v297 = vadd.f32 %v76, %v296
  %v298 = vpop.f32.mrf.mxu0
  %v299 = vadd.f32 %v76, %v298
  %300 = vmatmul.bf16.gmra.mxu0 %v156
  %v301 = vpop.f32.mrf.mxu0
  %v302 = vadd.f32 %v76, %v301
  %v303 = vpop.f32.mrf.mxu0
  %v304 = vadd.f32 %v76, %v303
  %305 = vmatmul.bf16.gmra.mxu0 %v157
  %v306 = vpop.f32.mrf.mxu0
  %v307 = vadd.f32 %v76, %v306
  %v308 = vpop.f32.mrf.mxu0
  %v309 = vadd.f32 %v76, %v308
  %310 = vdwg.mxu0
  %v311 = vmax.f32 %v232, 0.0
  %v312 = vmax.f32 %v234, 0.0
  %v313 = vmax.f32 %v237, 0.0
  %v314 = vmax.f32 %v239, 0.0
  %v315 = vmax.f32 %v242, 0.0
  %v316 = vmax.f32 %v244, 0.0
  %v317 = vmax.f32 %v247, 0.0
  %v318 = vmax.f32 %v249, 0.0
  %v319 = vmax.f32 %v252, 0.0
  %v320 = vmax.f32 %v254, 0.0
  %v321 = vmax.f32 %v257, 0.0
  %v322 = vmax.f32 %v259, 0.0
  %v323 = vmax.f32 %v262, 0.0
  %v324 = vmax.f32 %v264, 0.0
  %v325 = vmax.f32 %v267, 0.0
  %v326 = vmax.f32 %v269, 0.0
  %v327 = vmax.f32 %v272, 0.0
  %v328 = vmax.f32 %v274, 0.0
  %v329 = vmax.f32 %v277, 0.0
  %v330 = vmax.f32 %v279, 0.0
  %v331 = vmax.f32 %v282, 0.0
  %v332 = vmax.f32 %v284, 0.0
  %v333 = vmax.f32 %v287, 0.0
  %v334 = vmax.f32 %v289, 0.0
  %v335 = vmax.f32 %v292, 0.0
  %v336 = vmax.f32 %v294, 0.0
  %v337 = vmax.f32 %v297, 0.0
  %v338 = vmax.f32 %v299, 0.0
  %v339 = vmax.f32 %v302, 0.0
  %v340 = vmax.f32 %v304, 0.0
  %v341 = vmax.f32 %v307, 0.0
  %v342 = vmax.f32 %v309, 0.0
  %v343 = vpack.c.bf16 %v312, %v311
  %v344 = vpack.c.bf16 %v314, %v313
  %v345 = vpack.c.bf16 %v316, %v315
  %v346 = vpack.c.bf16 %v318, %v317
  %v347 = vpack.c.bf16 %v320, %v319
  %v348 = vpack.c.bf16 %v322, %v321
  %v349 = vpack.c.bf16 %v324, %v323
  %v350 = vpack.c.bf16 %v326, %v325
  %v351 = vpack.c.bf16 %v328, %v327
  %v352 = vpack.c.bf16 %v330, %v329
  %v353 = vpack.c.bf16 %v332, %v331
  %v354 = vpack.c.bf16 %v334, %v333
  %v355 = vpack.c.bf16 %v336, %v335
  %v356 = vpack.c.bf16 %v338, %v337
  %v357 = vpack.c.bf16 %v340, %v339
  %v358 = vpack.c.bf16 %v342, %v341
  %v359 = vld [vmem:[%s3] sm:$0xf]
  %v360 = vld [vmem:[%s3 + $0x4] sm:$0xf]
  %v361 = vld [vmem:[%s3 + $0x8] sm:$0xf]
  %v362 = vld [vmem:[%s3 + $0xc] sm:$0xf]
  %v363 = vld [vmem:[%s3 + $0x10] sm:$0xf]
  %v364 = vld [vmem:[%s3 + $0x14] sm:$0xf]
  %v365 = vld [vmem:[%s3 + $0x18] sm:$0xf]
  %v366 = vld [vmem:[%s3 + $0x1c] sm:$0xf]
  %v367 = vld [vmem:[%s3 + $0x20] sm:$0xf]
  %v368 = vld [vmem:[%s3 + $0x24] sm:$0xf]
  %v369 = vld [vmem:[%s3 + $0x28] sm:$0xf]
  %v370 = vld [vmem:[%s3 + $0x2c] sm:$0xf]
  %v371 = vld [vmem:[%s3 + $0x30] sm:$0xf]
  %v372 = vld [vmem:[%s3 + $0x34] sm:$0xf]
  %v373 = vld [vmem:[%s3 + $0x38] sm:$0xf]
  %v374 = vld [vmem:[%s3 + $0x3c] sm:$0xf]
  %v375 = vld [vmem:[%s4] sm:$0x1]
  %v377 = vperm.slane %v375, 0
  %v395 = vunpack.c.l.b16 %v359
  %v396 = vunpack.c.l.b16 %v360
  %v397 = vunpack.c.l.b16 %v361
  %v398 = vunpack.c.l.b16 %v362
  %v399 = vunpack.c.l.b16 %v363
  %v400 = vunpack.c.l.b16 %v364
  %v401 = vunpack.c.l.b16 %v365
  %v402 = vunpack.c.l.b16 %v366
  %v403 = vunpack.c.l.b16 %v367
  %v404 = vunpack.c.l.b16 %v368
  %v405 = vunpack.c.l.b16 %v369
  %v406 = vunpack.c.l.b16 %v370
  %v407 = vunpack.c.l.b16 %v371
  %v408 = vunpack.c.l.b16 %v372
  %v409 = vunpack.c.l.b16 %v373
  %v410 = vunpack.c.l.b16 %v374
  %v411 = vpack.c.b16 %v396, %v395
  %v412 = vpack.c.b16 %v398, %v397
  %v413 = vpack.c.b16 %v400, %v399
  %v414 = vpack.c.b16 %v402, %v401
  %v415 = vpack.c.b16 %v404, %v403
  %v416 = vpack.c.b16 %v406, %v405
  %v417 = vpack.c.b16 %v408, %v407
  %v418 = vpack.c.b16 %v410, %v409
  %427 = vmatpush.bf16.msra.mxu0 %v418
  %428 = vmatpush.bf16.msra.mxu0 %v417
  %429 = vmatpush.bf16.msra.mxu0 %v416
  %430 = vmatpush.bf16.msra.mxu0 %v415
  %431 = vmatpush.bf16.msra.mxu0 %v414
  %432 = vmatpush.bf16.msra.mxu0 %v413
  %433 = vmatpush.bf16.msra.mxu0 %v412
  %434 = vmatpush.bf16.msra.mxu0 %v411
  %435 = vmatmul.bf16.gmra.mxu0 %v343
  %v436 = vpop.f32.mrf.mxu0
  %v437 = vadd.f32 %v377, %v436
  %v438 = vpop.f32.mrf.mxu0
  %v439 = vadd.f32 %v377, %v438
  %440 = vmatmul.bf16.gmra.mxu0 %v344
  %v441 = vpop.f32.mrf.mxu0
  %v442 = vadd.f32 %v377, %v441
  %v443 = vpop.f32.mrf.mxu0
  %v444 = vadd.f32 %v377, %v443
  %445 = vmatmul.bf16.gmra.mxu0 %v345
  %v446 = vpop.f32.mrf.mxu0
  %v447 = vadd.f32 %v377, %v446
  %v448 = vpop.f32.mrf.mxu0
  %v449 = vadd.f32 %v377, %v448
  %450 = vmatmul.bf16.gmra.mxu0 %v346
  %v451 = vpop.f32.mrf.mxu0
  %v452 = vadd.f32 %v377, %v451
  %v453 = vpop.f32.mrf.mxu0
  %v454 = vadd.f32 %v377, %v453
  %455 = vmatmul.bf16.gmra.mxu0 %v347
  %v456 = vpop.f32.mrf.mxu0
  %v457 = vadd.f32 %v377, %v456
  %v458 = vpop.f32.mrf.mxu0
  %v459 = vadd.f32 %v377, %v458
  %460 = vmatmul.bf16.gmra.mxu0 %v348
  %v461 = vpop.f32.mrf.mxu0
  %v462 = vadd.f32 %v377, %v461
  %v463 = vpop.f32.mrf.mxu0
  %v464 = vadd.f32 %v377, %v463
  %465 = vmatmul.bf16.gmra.mxu0 %v349
  %v466 = vpop.f32.mrf.mxu0
  %v467 = vadd.f32 %v377, %v466
  %v468 = vpop.f32.mrf.mxu0
  %v469 = vadd.f32 %v377, %v468
  %470 = vmatmul.bf16.gmra.mxu0 %v350
  %v471 = vpop.f32.mrf.mxu0
  %v472 = vadd.f32 %v377, %v471
  %v473 = vpop.f32.mrf.mxu0
  %v474 = vadd.f32 %v377, %v473
  %475 = vmatmul.bf16.gmra.mxu0 %v351
  %v476 = vpop.f32.mrf.mxu0
  %v477 = vadd.f32 %v377, %v476
  %v478 = vpop.f32.mrf.mxu0
  %v479 = vadd.f32 %v377, %v478
  %480 = vmatmul.bf16.gmra.mxu0 %v352
  %v481 = vpop.f32.mrf.mxu0
  %v482 = vadd.f32 %v377, %v481
  %v483 = vpop.f32.mrf.mxu0
  %v484 = vadd.f32 %v377, %v483
  %485 = vmatmul.bf16.gmra.mxu0 %v353
  %v486 = vpop.f32.mrf.mxu0
  %v487 = vadd.f32 %v377, %v486
  %v488 = vpop.f32.mrf.mxu0
  %v489 = vadd.f32 %v377, %v488
  %490 = vmatmul.bf16.gmra.mxu0 %v354
  %v491 = vpop.f32.mrf.mxu0
  %v492 = vadd.f32 %v377, %v491
  %v493 = vpop.f32.mrf.mxu0
  %v494 = vadd.f32 %v377, %v493
  %495 = vmatmul.bf16.gmra.mxu0 %v355
  %v496 = vpop.f32.mrf.mxu0
  %v497 = vadd.f32 %v377, %v496
  %v498 = vpop.f32.mrf.mxu0
  %v499 = vadd.f32 %v377, %v498
  %500 = vmatmul.bf16.gmra.mxu0 %v356
  %v501 = vpop.f32.mrf.mxu0
  %v502 = vadd.f32 %v377, %v501
  %v503 = vpop.f32.mrf.mxu0
  %v504 = vadd.f32 %v377, %v503
  %505 = vmatmul.bf16.gmra.mxu0 %v357
  %v506 = vpop.f32.mrf.mxu0
  %v507 = vadd.f32 %v377, %v506
  %v508 = vpop.f32.mrf.mxu0
  %v509 = vadd.f32 %v377, %v508
  %510 = vmatmul.bf16.gmra.mxu0 %v358
  %v511 = vpop.f32.mrf.mxu0
  %v512 = vadd.f32 %v377, %v511
  %v513 = vpop.f32.mrf.mxu0
  %v514 = vadd.f32 %v377, %v513
  %515 = vdwg.mxu0
  %v516 = vmax.f32 %v437, 0.0
  %v517 = vmax.f32 %v439, 0.0
  %v518 = vmax.f32 %v442, 0.0
  %v519 = vmax.f32 %v444, 0.0
  %v520 = vmax.f32 %v447, 0.0
  %v521 = vmax.f32 %v449, 0.0
  %v522 = vmax.f32 %v452, 0.0
  %v523 = vmax.f32 %v454, 0.0
  %v524 = vmax.f32 %v457, 0.0
  %v525 = vmax.f32 %v459, 0.0
  %v526 = vmax.f32 %v462, 0.0
  %v527 = vmax.f32 %v464, 0.0
  %v528 = vmax.f32 %v467, 0.0
  %v529 = vmax.f32 %v469, 0.0
  %v530 = vmax.f32 %v472, 0.0
  %v531 = vmax.f32 %v474, 0.0
  %v532 = vmax.f32 %v477, 0.0
  %v533 = vmax.f32 %v479, 0.0
  %v534 = vmax.f32 %v482, 0.0
  %v535 = vmax.f32 %v484, 0.0
  %v536 = vmax.f32 %v487, 0.0
  %v537 = vmax.f32 %v489, 0.0
  %v538 = vmax.f32 %v492, 0.0
  %v539 = vmax.f32 %v494, 0.0
  %v540 = vmax.f32 %v497, 0.0
  %v541 = vmax.f32 %v499, 0.0
  %v542 = vmax.f32 %v502, 0.0
  %v543 = vmax.f32 %v504, 0.0
  %v544 = vmax.f32 %v507, 0.0
  %v545 = vmax.f32 %v509, 0.0
  %v546 = vmax.f32 %v512, 0.0
  %v547 = vmax.f32 %v514, 0.0
  %v548 = vpack.c.bf16 %v517, %v516
  %v549 = vpack.c.bf16 %v519, %v518
  %v550 = vpack.c.bf16 %v521, %v520
  %v551 = vpack.c.bf16 %v523, %v522
  %v552 = vpack.c.bf16 %v525, %v524
  %v553 = vpack.c.bf16 %v527, %v526
  %v554 = vpack.c.bf16 %v529, %v528
  %v555 = vpack.c.bf16 %v531, %v530
  %v556 = vpack.c.bf16 %v533, %v532
  %v557 = vpack.c.bf16 %v535, %v534
  %v558 = vpack.c.bf16 %v537, %v536
  %v559 = vpack.c.bf16 %v539, %v538
  %v560 = vpack.c.bf16 %v541, %v540
  %v561 = vpack.c.bf16 %v543, %v542
  %v562 = vpack.c.bf16 %v545, %v544
  %v563 = vpack.c.bf16 %v547, %v546
  %v564 = vld [vmem:[%s5] sm:$0xf]
  %v565 = vld [vmem:[%s5 + $0x4] sm:$0xf]
  %v566 = vld [vmem:[%s5 + $0x8] sm:$0xf]
  %v567 = vld [vmem:[%s5 + $0xc] sm:$0xf]
  %v568 = vld [vmem:[%s5 + $0x10] sm:$0xf]
  %v569 = vld [vmem:[%s5 + $0x14] sm:$0xf]
  %v570 = vld [vmem:[%s5 + $0x18] sm:$0xf]
  %v571 = vld [vmem:[%s5 + $0x1c] sm:$0xf]
  %v572 = vld [vmem:[%s5 + $0x20] sm:$0xf]
  %v573 = vld [vmem:[%s5 + $0x24] sm:$0xf]
  %v574 = vld [vmem:[%s5 + $0x28] sm:$0xf]
  %v575 = vld [vmem:[%s5 + $0x2c] sm:$0xf]
  %v576 = vld [vmem:[%s5 + $0x30] sm:$0xf]
  %v577 = vld [vmem:[%s5 + $0x34] sm:$0xf]
  %v578 = vld [vmem:[%s5 + $0x38] sm:$0xf]
  %v579 = vld [vmem:[%s5 + $0x3c] sm:$0xf]
  %v580 = vld [vmem:[%s6] sm:$0x1]
  %v582 = vperm.slane %v580, 0
  %v600 = vunpack.c.l.b16 %v564
  %v601 = vunpack.c.l.b16 %v565
  %v602 = vunpack.c.l.b16 %v566
  %v603 = vunpack.c.l.b16 %v567
  %v604 = vunpack.c.l.b16 %v568
  %v605 = vunpack.c.l.b16 %v569
  %v606 = vunpack.c.l.b16 %v570
  %v607 = vunpack.c.l.b16 %v571
  %v608 = vunpack.c.l.b16 %v572
  %v609 = vunpack.c.l.b16 %v573
  %v610 = vunpack.c.l.b16 %v574
  %v611 = vunpack.c.l.b16 %v575
  %v612 = vunpack.c.l.b16 %v576
  %v613 = vunpack.c.l.b16 %v577
  %v614 = vunpack.c.l.b16 %v578
  %v615 = vunpack.c.l.b16 %v579
  %v616 = vpack.c.b16 %v601, %v600
  %v617 = vpack.c.b16 %v603, %v602
  %v618 = vpack.c.b16 %v605, %v604
  %v619 = vpack.c.b16 %v607, %v606
  %v620 = vpack.c.b16 %v609, %v608
  %v621 = vpack.c.b16 %v611, %v610
  %v622 = vpack.c.b16 %v613, %v612
  %v623 = vpack.c.b16 %v615, %v614
  %632 = vmatpush.bf16.msra.mxu0 %v623
  %633 = vmatpush.bf16.msra.mxu0 %v622
  %634 = vmatpush.bf16.msra.mxu0 %v621
  %635 = vmatpush.bf16.msra.mxu0 %v620
  %636 = vmatpush.bf16.msra.mxu0 %v619
  %637 = vmatpush.bf16.msra.mxu0 %v618
  %638 = vmatpush.bf16.msra.mxu0 %v617
  %639 = vmatpush.bf16.msra.mxu0 %v616
  %640 = vmatmul.bf16.gmra.mxu0 %v548
  %v641 = vpop.f32.mrf.mxu0
  %v642 = vadd.f32 %v582, %v641
  %v643 = vpop.f32.mrf.mxu0
  %v644 = vadd.f32 %v582, %v643
  %645 = vmatmul.bf16.gmra.mxu0 %v549
  %v646 = vpop.f32.mrf.mxu0
  %v647 = vadd.f32 %v582, %v646
  %v648 = vpop.f32.mrf.mxu0
  %v649 = vadd.f32 %v582, %v648
  %650 = vmatmul.bf16.gmra.mxu0 %v550
  %v651 = vpop.f32.mrf.mxu0
  %v652 = vadd.f32 %v582, %v651
  %v653 = vpop.f32.mrf.mxu0
  %v654 = vadd.f32 %v582, %v653
  %655 = vmatmul.bf16.gmra.mxu0 %v551
  %v656 = vpop.f32.mrf.mxu0
  %v657 = vadd.f32 %v582, %v656
  %v658 = vpop.f32.mrf.mxu0
  %v659 = vadd.f32 %v582, %v658
  %660 = vmatmul.bf16.gmra.mxu0 %v552
  %v661 = vpop.f32.mrf.mxu0
  %v662 = vadd.f32 %v582, %v661
  %v663 = vpop.f32.mrf.mxu0
  %v664 = vadd.f32 %v582, %v663
  %665 = vmatmul.bf16.gmra.mxu0 %v553
  %v666 = vpop.f32.mrf.mxu0
  %v667 = vadd.f32 %v582, %v666
  %v668 = vpop.f32.mrf.mxu0
  %v669 = vadd.f32 %v582, %v668
  %670 = vmatmul.bf16.gmra.mxu0 %v554
  %v671 = vpop.f32.mrf.mxu0
  %v672 = vadd.f32 %v582, %v671
  %v673 = vpop.f32.mrf.mxu0
  %v674 = vadd.f32 %v582, %v673
  %675 = vmatmul.bf16.gmra.mxu0 %v555
  %v676 = vpop.f32.mrf.mxu0
  %v677 = vadd.f32 %v582, %v676
  %v678 = vpop.f32.mrf.mxu0
  %v679 = vadd.f32 %v582, %v678
  %680 = vmatmul.bf16.gmra.mxu0 %v556
  %v681 = vpop.f32.mrf.mxu0
  %v682 = vadd.f32 %v582, %v681
  %v683 = vpop.f32.mrf.mxu0
  %v684 = vadd.f32 %v582, %v683
  %685 = vmatmul.bf16.gmra.mxu0 %v557
  %v686 = vpop.f32.mrf.mxu0
  %v687 = vadd.f32 %v582, %v686
  %v688 = vpop.f32.mrf.mxu0
  %v689 = vadd.f32 %v582, %v688
  %690 = vmatmul.bf16.gmra.mxu0 %v558
  %v691 = vpop.f32.mrf.mxu0
  %v692 = vadd.f32 %v582, %v691
  %v693 = vpop.f32.mrf.mxu0
  %v694 = vadd.f32 %v582, %v693
  %695 = vmatmul.bf16.gmra.mxu0 %v559
  %v696 = vpop.f32.mrf.mxu0
  %v697 = vadd.f32 %v582, %v696
  %v698 = vpop.f32.mrf.mxu0
  %v699 = vadd.f32 %v582, %v698
  %700 = vmatmul.bf16.gmra.mxu0 %v560
  %v701 = vpop.f32.mrf.mxu0
  %v702 = vadd.f32 %v582, %v701
  %v703 = vpop.f32.mrf.mxu0
  %v704 = vadd.f32 %v582, %v703
  %705 = vmatmul.bf16.gmra.mxu0 %v561
  %v706 = vpop.f32.mrf.mxu0
  %v707 = vadd.f32 %v582, %v706
  %v708 = vpop.f32.mrf.mxu0
  %v709 = vadd.f32 %v582, %v708
  %710 = vmatmul.bf16.gmra.mxu0 %v562
  %v711 = vpop.f32.mrf.mxu0
  %v712 = vadd.f32 %v582, %v711
  %v713 = vpop.f32.mrf.mxu0
  %v714 = vadd.f32 %v582, %v713
  %715 = vmatmul.bf16.gmra.mxu0 %v563
  %v716 = vpop.f32.mrf.mxu0
  %v717 = vadd.f32 %v582, %v716
  %v718 = vpop.f32.mrf.mxu0
  %v719 = vadd.f32 %v582, %v718
  %720 = vdwg.mxu0
  %721 = vst [vmem:[%s7] sm:$0xff] %v642
  %722 = vst [vmem:[%s7 + $0x8] sm:$0xff] %v644
  %723 = vst [vmem:[%s7 + $0x10] sm:$0xff] %v647
  %724 = vst [vmem:[%s7 + $0x18] sm:$0xff] %v649
  %725 = vst [vmem:[%s7 + $0x20] sm:$0xff] %v652
  %726 = vst [vmem:[%s7 + $0x28] sm:$0xff] %v654
  %727 = vst [vmem:[%s7 + $0x30] sm:$0xff] %v657
  %728 = vst [vmem:[%s7 + $0x38] sm:$0xff] %v659
  %729 = vst [vmem:[%s7 + $0x40] sm:$0xff] %v662
  %730 = vst [vmem:[%s7 + $0x48] sm:$0xff] %v664
  %731 = vst [vmem:[%s7 + $0x50] sm:$0xff] %v667
  %732 = vst [vmem:[%s7 + $0x58] sm:$0xff] %v669
  %733 = vst [vmem:[%s7 + $0x60] sm:$0xff] %v672
  %734 = vst [vmem:[%s7 + $0x68] sm:$0xff] %v674
  %735 = vst [vmem:[%s7 + $0x70] sm:$0xff] %v677
  %736 = vst [vmem:[%s7 + $0x78] sm:$0xff] %v679
  %737 = vst [vmem:[%s7 + $0x80] sm:$0xff] %v682
  %738 = vst [vmem:[%s7 + $0x88] sm:$0xff] %v684
  %739 = vst [vmem:[%s7 + $0x90] sm:$0xff] %v687
  %740 = vst [vmem:[%s7 + $0x98] sm:$0xff] %v689
  %741 = vst [vmem:[%s7 + $0xa0] sm:$0xff] %v692
  %742 = vst [vmem:[%s7 + $0xa8] sm:$0xff] %v694
  %743 = vst [vmem:[%s7 + $0xb0] sm:$0xff] %v697
  %744 = vst [vmem:[%s7 + $0xb8] sm:$0xff] %v699
  %745 = vst [vmem:[%s7 + $0xc0] sm:$0xff] %v702
  %746 = vst [vmem:[%s7 + $0xc8] sm:$0xff] %v704
  %747 = vst [vmem:[%s7 + $0xd0] sm:$0xff] %v707
  %748 = vst [vmem:[%s7 + $0xd8] sm:$0xff] %v709
  %749 = vst [vmem:[%s7 + $0xe0] sm:$0xff] %v712
  %750 = vst [vmem:[%s7 + $0xe8] sm:$0xff] %v714
  %751 = vst [vmem:[%s7 + $0xf0] sm:$0xff] %v717
  %752 = vst [vmem:[%s7 + $0xf8] sm:$0xff] %v719
  // Predicated region
  $region30: #{dqn_forward.1} parent=0 // pred_check
    _
  $region31: #{dqn_forward.1} parent=0 // pred_check_branch
    %754 = sbr.rel (0) target = $region33
  $region32: #{dqn_forward.1} parent=0 // pred_region
    _
  $region33: #{dqn_forward.1} parent=0 // pred_fallthru
    _
  // Predicated region
  $region34: #{dqn_forward.1} parent=0 // pred_check
    _
  $region35: #{dqn_forward.1} parent=0 // pred_check_branch
    %756 = sbr.rel (0) target = $region37
  $region36: #{dqn_forward.1} parent=0 // pred_region
    _
  $region37: #{dqn_forward.1} parent=0 // pred_fallthru
    _

</llo_original>
